<compile_context>
chip_gen: v6e
topology: v6e:2x2x1
jax: 0.10.0
libtpu: 0.0.40
codegen_flags: <defaults>
</compile_context>

<pallas_src>
import functools

import numpy as np
import jax
import jax.numpy as jnp
from jax import lax
from jax.experimental import pallas as pl
from jax.experimental.pallas import tpu as pltpu


_VMEM_DATA_BUDGET = 12 * 1024 * 1024   # double-buffered x/idx/out blocks
_VMEM_LIMIT_BYTES = 32 * 1024 * 1024   # fits v5e/v6e (128 MiB) and v7x (64 MiB)


# ----------------------------------------------------------------------------
# Tiling
# ----------------------------------------------------------------------------
def _tiles(rows, T, pool_size, x_itemsize, idx_itemsize=0):
    """(row_tile, time_tile, mxu_chunk).

    Time tile is a fixed 128/256-lane DMA tile (full extent for short T); the
    MXU contraction is a fixed <=128-wide chunk.  The row (sublane) tile grows
    until double-buffered x/idx/out blocks hit the VMEM budget, targeting
    multiple MiB of HBM traffic per grid step.
    """
    if T <= 128:
        tt = T                       # full-extent lane block (always legal)
    elif T < 256:
        tt = 128
    else:
        tt = 256
    chunk = min(128, tt)
    per_row = tt * (x_itemsize * (1 + pool_size) + idx_itemsize)
    rt = _VMEM_DATA_BUDGET // (2 * per_row)
    cap = 2048 if x_itemsize <= 2 else 1024
    rt = max(8, min(cap, (rt // 8) * 8))
    if rows <= rt:
        rt = rows                    # single full-extent row block
    return rt, tt, chunk


def _matmul_modes(dtype):
    # bf16: bf16 accumulate halves intermediates (a 0/1 selection stays exact).
    # f32 : HIGHEST keeps the selection matmul bit-exact; K<=128 keeps the MXU
    #       cost negligible even on v5e's f32 multi-pass path.
    if dtype == jnp.bfloat16:
        return jnp.bfloat16, lax.Precision.DEFAULT
    if dtype == jnp.float32:
        return jnp.float32, lax.Precision.HIGHEST
    return jnp.float32, lax.Precision.DEFAULT


def _compiler_params():
    return pltpu.CompilerParams(
        dimension_semantics=("parallel", "parallel"),
        vmem_limit_bytes=_VMEM_LIMIT_BYTES)


# ----------------------------------------------------------------------------
# Kernels
# ----------------------------------------------------------------------------
def _sel_matrix(chunk, pool_size, dtype):
    """S[t, j] = 1 iff j in [t*P, (t+1)*P)  -- shape (chunk, chunk*P).

    x_chunk @ S performs the nearest-neighbour interleave on the otherwise-idle
    MXU, producing a lane-dense output chunk.  Built in-kernel from iotas (no
    HBM stream, no integer division)."""
    t = lax.broadcasted_iota(jnp.int32, (chunk, chunk * pool_size), 0)
    j = lax.broadcasted_iota(jnp.int32, (chunk, chunk * pool_size), 1)
    start = t * pool_size
    return ((j >= start) & (j < start + pool_size)).astype(dtype)


def _col_valid(tt, total_t):
    col = lax.broadcasted_iota(jnp.int32, (1, tt), 1) + pl.program_id(1) * tt
    return col < total_t


def _upsample_kernel(x_ref, o_ref, *, pool_size, chunk, total_t, ragged_t,
                     acc_dtype, precision):
    """o[r, t*P + k] = x[r, t] via chunked lane-dense MXU selection matmuls."""
    P = pool_size
    tt = x_ref.shape[-1]
    sel = _sel_matrix(chunk, P, x_ref.dtype)
    col_ok = _col_valid(tt, total_t) if ragged_t else None
    for ci in range(tt // chunk):            # 1-2 chunks, statically unrolled
        lo, hi = ci * chunk, (ci + 1) * chunk
        xc = x_ref[:, lo:hi]
        if ragged_t:
            # Zero padded lanes so OOB garbage (possibly NaN/Inf) cannot leak
            # into in-bounds columns through the matmul (NaN * 0 == NaN).
            xc = jnp.where(col_ok[:, lo:hi], xc, 0)
        up = jnp.dot(xc, sel, preferred_element_type=acc_dtype,
                     precision=precision)
        o_ref[:, lo * P:hi * P] = up.astype(o_ref.dtype)


def _max_unpool_kernel(x_ref, idx_ref, kpat_ref, o_ref, *, pool_size, chunk,
                       total_t, ragged_t, acc_dtype, precision):
    """o[r, t*P + k] = x[r, t] if idx[r, t] == t*P + k else 0.

    Assumes MaxPool1d-style window-local indices (idx[..., t] in [t*P,(t+1)*P)).
    # TODO(synk): arbitrary (non window-local) global indices would need a true
    # cross-tile scatter; nn.MaxUnpool1d(kernel_size=pool_size) applied to
    # MaxPool1d(pool_size) output never produces them.
    """
    P = pool_size
    tt = x_ref.shape[-1]
    sel = _sel_matrix(chunk, P, x_ref.dtype)
    k_pat = kpat_ref[...]                    # (1, chunk*P) int32 == j % P
    t_base = pl.program_id(1) * tt
    col_ok = _col_valid(tt, total_t) if ragged_t else None
    for ci in range(tt // chunk):
        lo, hi = ci * chunk, (ci + 1) * chunk
        xc = x_ref[:, lo:hi]
        if ragged_t:
            xc = jnp.where(col_ok[:, lo:hi], xc, 0)
        # Window-local offset in [0, P): subtraction instead of vector int rem.
        # (Exact in bf16 for P <= 256, exact in f32 always.)
        t_glob = lax.broadcasted_iota(jnp.int32, (1, chunk), 1) + (t_base + lo)
        local = (idx_ref[:, lo:hi] - t_glob * P).astype(x_ref.dtype)
        x_up = jnp.dot(xc, sel, preferred_element_type=acc_dtype,
                       precision=precision)
        loc_up = jnp.dot(local, sel, preferred_element_type=jnp.float32,
                         precision=precision)
        keep = loc_up.astype(jnp.int32) == k_pat    # robust int compare
        o_ref[:, lo * P:hi * P] = jnp.where(keep, x_up, 0).astype(o_ref.dtype)


# ----------------------------------------------------------------------------
# Pallas wrappers
# ----------------------------------------------------------------------------
def upsample_pallas(x, pool_size):
    N, C, T = x.shape
    P = pool_size
    L = T * P
    R = N * C
    x2 = x.reshape(R, T)                    # NCT contiguous: free reshape
    rt, tt, chunk = _tiles(R, T, P, x.dtype.itemsize)
    lt = tt * P
    acc_dtype, precision = _matmul_modes(x.dtype)
    kernel = functools.partial(
        _upsample_kernel, pool_size=P, chunk=chunk, total_t=T,
        ragged_t=(T % tt != 0), acc_dtype=acc_dtype, precision=precision)
    nb = x.dtype.itemsize
    out = pl.pallas_call(
        kernel,
        out_shape=jax.ShapeDtypeStruct((R, L), x.dtype),
        grid=(pl.cdiv(R, rt), pl.cdiv(T, tt)),
        in_specs=[pl.BlockSpec((rt, tt), lambda r, t: (r, t))],
        out_specs=pl.BlockSpec((rt, lt), lambda r, t: (r, t)),
        compiler_params=_compiler_params(),
        cost_estimate=pl.CostEstimate(
            flops=0, transcendentals=0, bytes_accessed=R * (T + L) * nb),
    )(x2)
    return out.reshape(N, C, L)


def max_unpool_pallas(x, indices, pool_size):
    N, C, T = x.shape
    P = pool_size
    L = T * P
    R = N * C
    x2 = x.reshape(R, T)
    # TODO(synk): int32 global indices cost 4 B/elem on a purely HBM-bound op;
    # a pipeline fused with the pooling kernel could carry int8 window-local
    # offsets instead and cut the read traffic further.
    idx2 = indices.astype(jnp.int32).reshape(R, T)
    rt, tt, chunk = _tiles(R, T, P, x.dtype.itemsize, idx_itemsize=4)
    lt = tt * P
    acc_dtype, precision = _matmul_modes(x.dtype)
    k_pat = jnp.asarray((np.arange(chunk * P) % P)[None, :], dtype=jnp.int32)
    kernel = functools.partial(
        _max_unpool_kernel, pool_size=P, chunk=chunk, total_t=T,
        ragged_t=(T % tt != 0), acc_dtype=acc_dtype, precision=precision)
    nb = x.dtype.itemsize
    out = pl.pallas_call(
        kernel,
        out_shape=jax.ShapeDtypeStruct((R, L), x.dtype),
        grid=(pl.cdiv(R, rt), pl.cdiv(T, tt)),
        in_specs=[
            pl.BlockSpec((rt, tt), lambda r, t: (r, t)),
            pl.BlockSpec((rt, tt), lambda r, t: (r, t)),
            pl.BlockSpec((1, chunk * P), lambda r, t: (0, 0)),  # tiny, resident
        ],
        out_specs=pl.BlockSpec((rt, lt), lambda r, t: (r, t)),
        compiler_params=_compiler_params(),
        cost_estimate=pl.CostEstimate(
            flops=0, transcendentals=0,
            bytes_accessed=R * (T + L) * nb + R * T * 4),
    )(x2, idx2, k_pat)
    return out.reshape(N, C, L)


class Unpool1d:
    """1d MaxUnpooling if indices are provided else nearest upsampling."""

    def __init__(self, pool_size):
        self.pool_size = pool_size

    def __call__(self, x, seq_len=None, indices=None):
        if self.pool_size < 2:
            return x, seq_len
        if indices is None:
            x = upsample_pallas(x, self.pool_size)
        else:
            x = max_unpool_pallas(x, indices, self.pool_size)
        if seq_len is not None:
            seq_len = seq_len * self.pool_size
            # Matches the reference module exactly (np.maximum, host-side).
            seq_len = np.maximum(seq_len, x.shape[-1])
        return x, seq_len


# ----------------------------------------------------------------------------
# Plain-JAX references & tests
# ----------------------------------------------------------------------------
def _upsample_ref(x, P):
    return jnp.repeat(x, P, axis=-1)


def _max_unpool_ref(x, indices, P):
    N, C, T = x.shape
    out = jnp.zeros((N, C, T * P), x.dtype)
    n = jnp.arange(N)[:, None, None]
    c = jnp.arange(C)[None, :, None]
    return out.at[n, c, indices].set(x)


def _make_indices(key, N, C, T, P):
    # Valid MaxPool1d(kernel=stride=P) indices: window-local positions.
    off = jax.random.randint(key, (N, C, T), 0, P, dtype=jnp.int32)
    return jnp.arange(T, dtype=jnp.int32)[None, None, :] * P + off


def _check(N, C, T, P, dtype, key):
    kx, ki = jax.random.split(key)
    x = jax.random.normal(kx, (N, C, T), dtype=jnp.float32)
    # bf16-representable values -> the 0/1 selection matmul is bit-exact under
    # any MXU precision mode, so exact assertions are valid below.
    x = x.astype(jnp.bfloat16).astype(dtype)
    idx = _make_indices(ki, N, C, T, P)
    mod = Unpool1d(P)

    y_up, _ = mod(x, indices=None)
    y_up = jax.block_until_ready(y_up)
    assert y_up.shape == (N, C, T * P)
    np.testing.assert_array_equal(
        np.asarray(y_up.astype(jnp.float32)),
        np.asarray(_upsample_ref(x, P).astype(jnp.float32)))

    y_un, _ = mod(x, indices=idx)
    y_un = jax.block_until_ready(y_un)
    assert y_un.shape == (N, C, T * P)
    np.testing.assert_array_equal(
        np.asarray(y_un.astype(jnp.float32)),
        np.asarray(_max_unpool_ref(x, idx, P).astype(jnp.float32)))


if __name__ == "__main__":
    key = jax.random.PRNGKey(0)
    keys = jax.random.split(key, 8)

    # Small shapes consistent with the module (batch=2, channels=4, time=16).
    _check(2, 4, 16, 2, jnp.float32, keys[0])     # basic f32, P=2
    _check(2, 4, 16, 3, jnp.float32, keys[1])     # non-power-of-two pool size
    _check(2, 3, 200, 2, jnp.float32, keys[2])    # ragged time tiling (cdiv path)
    _check(2, 8, 128, 2, jnp.bfloat16, keys[3])   # bf16 path, native tiles

    # seq_len handling + identity path.
    x = jax.random.normal(keys[4], (2, 4, 16), dtype=jnp.float32)
    seq_len = np.array([16, 12], dtype=np.int64)
    y, sl = Unpool1d(2)(x, seq_len=seq_len)
    jax.block_until_ready(y)
    assert y.shape == (2, 4, 32)
    assert np.all(np.asarray(sl) == np.maximum(seq_len * 2, 32))
    y_id, sl_id = Unpool1d(1)(x, seq_len=seq_len)
    assert y_id is x and sl_id is seq_len

    print("KERNEL_OK")
</pallas_src>

<mosaic_0001>
module attributes {stable_mosaic.version = 11 : i64} {
  func.func @_upsample_kernel(%arg0: i32, %arg1: i32, %arg2: memref<8x16xf32, #tpu.memory_space<vmem>>, %arg3: memref<8x32xf32, #tpu.memory_space<vmem>>) attributes {dimension_semantics = [#tpu.dimension_semantics<parallel>, #tpu.dimension_semantics<parallel>], iteration_bounds = array<i64: 1, 1>, scalar_prefetch = 0 : i64, scratch_operands = 0 : i64, tpu.core_type = #tpu.core_type<tc>, window_params = [{transform_indices = @transform_0, window_bounds = array<i64: 8, 16>}, {transform_indices = @transform_1, window_bounds = array<i64: 8, 32>}]} {
    %0 = tpu.iota {dimensions = array<i32: 0>} : vector<16x32xi32>
    %1 = tpu.iota {dimensions = array<i32: 1>} : vector<16x32xi32>
    %c2_i32 = arith.constant 2 : i32
    %2 = vector.broadcast %c2_i32 : i32 to vector<16x32xi32>
    %3 = arith.muli %0, %2 : vector<16x32xi32>
    %4 = arith.cmpi sge, %1, %3 : vector<16x32xi32>
    %c2_i32_0 = arith.constant 2 : i32
    %5 = vector.broadcast %c2_i32_0 : i32 to vector<16x32xi32>
    %6 = arith.addi %3, %5 : vector<16x32xi32>
    %7 = arith.cmpi slt, %1, %6 : vector<16x32xi32>
    %8 = arith.andi %4, %7 : vector<16x32xi1>
    %9 = arith.extui %8 : vector<16x32xi1> to vector<16x32xi32>
    %10 = arith.sitofp %9 : vector<16x32xi32> to vector<16x32xf32>
    %c0 = arith.constant 0 : index
    %c0_1 = arith.constant 0 : index
    %11 = vector.load %arg2[%c0, %c0_1] : memref<8x16xf32, #tpu.memory_space<vmem>>, vector<8x16xf32>
    %cst = arith.constant dense<0.000000e+00> : vector<8x32xf32>
    %12 = tpu.matmul %11, %10, %cst {dimension_numbers = #tpu.dot_dimension_numbers<[1], [0], [0], [1], [0, 0, 1, 1], [], []>, precision = #tpu.contract_precision<fp32>} : vector<8x16xf32>, vector<16x32xf32>, vector<8x32xf32> -> vector<8x32xf32>
    %c0_2 = arith.constant 0 : index
    %c0_3 = arith.constant 0 : index
    %13 = vector.load %arg3[%c0_2, %c0_3] : memref<8x32xf32, #tpu.memory_space<vmem>>, vector<8x32xf32>
    tpu.vector_store %arg3[%c0_2, %c0_3], %12 {strides = array<i32>} : memref<8x32xf32, #tpu.memory_space<vmem>>, vector<8x32xf32>,
    return
  }
  func.func @transform_0(%arg0: i32, %arg1: i32) -> (i32, i32) {
    %c0_i32 = arith.constant 0 : i32
    return %arg0, %arg1 : i32, i32
  }
  func.func @transform_1(%arg0: i32, %arg1: i32) -> (i32, i32) {
    %c0_i32 = arith.constant 0 : i32
    return %arg0, %arg1 : i32, i32
  }
}

</mosaic_0001>

<llo_original>
// kernel: tpu_custom_call.1
$region0: #{tpu_custom_call.1}
  #allocation0 [shape = 'u32[]', space=smem, size = 0x4, offset = 0x4, fixed_abs, tag = 'smem constant byte address 0x4 - core index']
  #allocation1 [shape = 'u32[144,128]{1,0:T(1,128)}', space=vmem, size = 0x12000, scoped, tag = 'internal scratch']
  %s0 = inlined_call_operand.hbm [shape: f32[8,16], index: 0, kind: input, shape index: {}]
  %s1 = inlined_call_operand.hbm [shape: f32[8,32], index: 1, kind: output, shape index: {}]
  %s2 = sld [smem:[#allocation0]]
  $region18: #{tpu_custom_call.1} parent=0
    _
  %s4 = ssub.s32 1, %s2
  %s5 = scalar_select 0, %s4, %s2
  $region1: #{tpu_custom_call.1} parent=0
    #allocation2 [shape = 'u8[4096]{0}', space=vmem, size = 0x1000, scoped, tag = 'input window, operand 0, single buffered']
    #allocation3 [shape = 's32[1]{0}', space=sflag, size = 0x4, scoped, tag = 'scoped memory for tpu_custom_call.1']
    #allocation4 [shape = 's32[1]{0}', space=sflag, size = 0x4, scoped, tag = 'scoped memory for tpu_custom_call.1']
    #allocation5 [shape = 'u8[4096]{0}', space=vmem, size = 0x1000, scoped, tag = 'output window, operand 0, single buffered']
    %6 = vsyncpa [#allocation3], 0
    %7 = vsyncpa [#allocation4], 0
    // Predicated region
    $region2: #{tpu_custom_call.1} parent=1 // pred_check
      _
    $region3: #{tpu_custom_call.1} parent=1 // pred_check_branch
      %9 = sbr.rel (0) target = $region5
    $region4: #{tpu_custom_call.1} parent=1 // pred_region
      %s11 = ssub.s32 128, 128
      %12 = vsyncadd [#allocation3], %s11
      %s14 = sshll.u32 [#allocation2], 4
      %s15 = int_to_ptr.vmem [resolvable:$true] %s14
      %17 = dma.hbm_to_vmem [thread:$0]  %s0, 128, %s15, [#allocation3]
    $region5: #{tpu_custom_call.1} parent=1 // pred_fallthru
      _
    // Predicated region
    $region6: #{tpu_custom_call.1} parent=1 // pred_check
      _
    $region7: #{tpu_custom_call.1} parent=1 // pred_check_branch
      %19 = sbr.rel (0) target = $region9
    $region8: #{tpu_custom_call.1} parent=1 // pred_region
      %20 = dma.done [#allocation3], 128
    $region9: #{tpu_custom_call.1} parent=1 // pred_fallthru
      _
    %v21 = vlaneseq
    %v22 = vshrl.u32 %v21, 7
    %v23 = vadd.s32 %v22, 8
    %v24 = vlaneseq
    %v25 = vand.u32 %v24, 127
    %v26 = vmul.u32 %v22, 2
    %v27 = vmul.u32 %v23, 2
    %vm28 = vcmp.ge.s32.totalorder %v25, %v26
    %vm29 = vcmp.ge.s32.totalorder %v25, %v27
    %v30 = vadd.s32 %v26, 2
    %v31 = vadd.s32 %v27, 2
    %vm32 = vcmp.lt.s32.totalorder %v25, %v30
    %vm33 = vcmp.lt.s32.totalorder %v25, %v31
    %vm34 = vmand %vm28, %vm32
    %vm35 = vmand %vm29, %vm33
    %v36 = vsel %vm34, 1, 0
    %v37 = vsel %vm35, 1, 0
    %v38 = vcvt.s32.f32 %v36
    %v39 = vcvt.s32.f32 %v37
    %v40 = vld [vmem:[#allocation2] sm:$0xff]
    %vm41 = vcmask 130048
    %v43 = vsel %vm41, %v40, 0
    %45 = vmatprep.subr.mxu0 0.0
    %46 = vmatpush1.msra.mxu0 0.0
    %47 = vmatprep.subr.mxu0 0.0
    %48 = vmatpush1.msra.mxu0 0.0
    %49 = vmatprep.subr.mxu0 0.0
    %50 = vmatpush1.msra.mxu0 0.0
    %51 = vmatprep.subr.mxu0 0.0
    %52 = vmatpush1.msra.mxu0 0.0
    %53 = vmatprep.subr.mxu0 0.0
    %54 = vmatpush1.msra.mxu0 0.0
    %55 = vmatprep.subr.mxu0 0.0
    %56 = vmatpush1.msra.mxu0 0.0
    %57 = vmatprep.subr.mxu0 0.0
    %58 = vmatpush1.msra.mxu0 0.0
    %59 = vmatprep.subr.mxu0 0.0
    %60 = vmatpush1.msra.mxu0 0.0
    %61 = vmatprep.subr.mxu0 0.0
    %62 = vmatpush1.msra.mxu0 0.0
    %63 = vmatprep.subr.mxu0 0.0
    %64 = vmatpush1.msra.mxu0 0.0
    %65 = vmatprep.subr.mxu0 0.0
    %66 = vmatpush1.msra.mxu0 0.0
    %67 = vmatprep.subr.mxu0 0.0
    %68 = vmatpush1.msra.mxu0 0.0
    %69 = vmatprep.subr.mxu0 0.0
    %70 = vmatpush1.msra.mxu0 0.0
    %71 = vmatprep.subr.mxu0 0.0
    %72 = vmatpush1.msra.mxu0 0.0
    %73 = vmatprep.subr.mxu0 0.0
    %v74 = vand.u32 %v39, 4294901760
    %75 = vmatpush1.msra.mxu0 %v74
    %76 = vmatprep.subr.mxu0 0.0
    %v77 = vand.u32 %v38, 4294901760
    %78 = vmatpush1.msra.mxu0 %v77
    %79 = vmatprep.subr.mxu0 0.0
    %80 = vmatpush2.msra.mxu0 0.0
    %81 = vmatprep.subr.mxu0 0.0
    %82 = vmatpush2.msra.mxu0 0.0
    %83 = vmatprep.subr.mxu0 0.0
    %84 = vmatpush2.msra.mxu0 0.0
    %85 = vmatprep.subr.mxu0 0.0
    %86 = vmatpush2.msra.mxu0 0.0
    %87 = vmatprep.subr.mxu0 0.0
    %88 = vmatpush2.msra.mxu0 0.0
    %89 = vmatprep.subr.mxu0 0.0
    %90 = vmatpush2.msra.mxu0 0.0
    %91 = vmatprep.subr.mxu0 0.0
    %92 = vmatpush2.msra.mxu0 0.0
    %93 = vmatprep.subr.mxu0 0.0
    %94 = vmatpush2.msra.mxu0 0.0
    %95 = vmatprep.subr.mxu0 0.0
    %96 = vmatpush2.msra.mxu0 0.0
    %97 = vmatprep.subr.mxu0 0.0
    %98 = vmatpush2.msra.mxu0 0.0
    %99 = vmatprep.subr.mxu0 0.0
    %100 = vmatpush2.msra.mxu0 0.0
    %101 = vmatprep.subr.mxu0 0.0
    %102 = vmatpush2.msra.mxu0 0.0
    %103 = vmatprep.subr.mxu0 0.0
    %104 = vmatpush2.msra.mxu0 0.0
    %105 = vmatprep.subr.mxu0 0.0
    %106 = vmatpush2.msra.mxu0 0.0
    %107 = vmatprep.subr.mxu0 0.0
    %108 = vmatpush2.msra.mxu0 0.0
    %109 = vmatprep.subr.mxu0 0.0
    %110 = vmatpush2.msra.mxu0 0.0
    %111 = vmatprep.mubr.f32.mxu0 0.0
    %v112 = vand.u32 %v43, 4294901760
    %v113 = vsub.f32 %v43, %v112
    %v114 = vand.u32 %v113, 4294901760
    %v115 = vsub.f32 %v113, %v114
    %v116 = vand.u32 %v115, 4294901760
    %117 = vmatmul.mubr.f32.gmra.mxu0 %v116
    %v118 = vpop.f32.mrf.mxu0
    %v119 = vadd.f32 0.0, %v118
    %v120 = vpop.f32.mrf.mxu0
    %121 = vdwg.mxu0
    %122 = vmatprep.subr.mxu0 0.0
    %123 = vmatpush1.msra.mxu0 0.0
    %124 = vmatprep.subr.mxu0 0.0
    %125 = vmatpush1.msra.mxu0 0.0
    %126 = vmatprep.subr.mxu0 0.0
    %127 = vmatpush1.msra.mxu0 0.0
    %128 = vmatprep.subr.mxu0 0.0
    %129 = vmatpush1.msra.mxu0 0.0
    %130 = vmatprep.subr.mxu0 0.0
    %131 = vmatpush1.msra.mxu0 0.0
    %132 = vmatprep.subr.mxu0 0.0
    %133 = vmatpush1.msra.mxu0 0.0
    %134 = vmatprep.subr.mxu0 0.0
    %135 = vmatpush1.msra.mxu0 0.0
    %136 = vmatprep.subr.mxu0 0.0
    %137 = vmatpush1.msra.mxu0 0.0
    %138 = vmatprep.subr.mxu0 0.0
    %139 = vmatpush1.msra.mxu0 0.0
    %140 = vmatprep.subr.mxu0 0.0
    %141 = vmatpush1.msra.mxu0 0.0
    %142 = vmatprep.subr.mxu0 0.0
    %143 = vmatpush1.msra.mxu0 0.0
    %144 = vmatprep.subr.mxu0 0.0
    %145 = vmatpush1.msra.mxu0 0.0
    %146 = vmatprep.subr.mxu0 0.0
    %147 = vmatpush1.msra.mxu0 0.0
    %148 = vmatprep.subr.mxu0 0.0
    %149 = vmatpush1.msra.mxu0 0.0
    %150 = vmatprep.subr.mxu0 0.0
    %v151 = vand.u32 %v39, 4294901760
    %v152 = vsub.f32 %v39, %v151
    %v153 = vand.u32 %v152, 4294901760
    %v154 = vsub.f32 %v152, %v153
    %v155 = vand.u32 %v154, 4294901760
    %156 = vmatpush1.msra.mxu0 %v155
    %157 = vmatprep.subr.mxu0 0.0
    %v158 = vand.u32 %v38, 4294901760
    %v159 = vsub.f32 %v38, %v158
    %v160 = vand.u32 %v159, 4294901760
    %v161 = vsub.f32 %v159, %v160
    %v162 = vand.u32 %v161, 4294901760
    %163 = vmatpush1.msra.mxu0 %v162
    %164 = vmatprep.subr.mxu0 0.0
    %165 = vmatpush2.msra.mxu0 0.0
    %166 = vmatprep.subr.mxu0 0.0
    %167 = vmatpush2.msra.mxu0 0.0
    %168 = vmatprep.subr.mxu0 0.0
    %169 = vmatpush2.msra.mxu0 0.0
    %170 = vmatprep.subr.mxu0 0.0
    %171 = vmatpush2.msra.mxu0 0.0
    %172 = vmatprep.subr.mxu0 0.0
    %173 = vmatpush2.msra.mxu0 0.0
    %174 = vmatprep.subr.mxu0 0.0
    %175 = vmatpush2.msra.mxu0 0.0
    %176 = vmatprep.subr.mxu0 0.0
    %177 = vmatpush2.msra.mxu0 0.0
    %178 = vmatprep.subr.mxu0 0.0
    %179 = vmatpush2.msra.mxu0 0.0
    %180 = vmatprep.subr.mxu0 0.0
    %181 = vmatpush2.msra.mxu0 0.0
    %182 = vmatprep.subr.mxu0 0.0
    %183 = vmatpush2.msra.mxu0 0.0
    %184 = vmatprep.subr.mxu0 0.0
    %185 = vmatpush2.msra.mxu0 0.0
    %186 = vmatprep.subr.mxu0 0.0
    %187 = vmatpush2.msra.mxu0 0.0
    %188 = vmatprep.subr.mxu0 0.0
    %189 = vmatpush2.msra.mxu0 0.0
    %190 = vmatprep.subr.mxu0 0.0
    %191 = vmatpush2.msra.mxu0 0.0
    %192 = vmatprep.subr.mxu0 0.0
    %193 = vmatpush2.msra.mxu0 0.0
    %194 = vmatprep.subr.mxu0 0.0
    %195 = vmatpush2.msra.mxu0 0.0
    %196 = vmatprep.mubr.f32.mxu0 0.0
    %v197 = vand.u32 %v43, 4294901760
    %198 = vmatmul.mubr.f32.gmra.mxu0 %v197
    %v199 = vpop.f32.mrf.mxu0
    %v200 = vadd.f32 %v119, %v199
    %v201 = vpop.f32.mrf.mxu0
    %202 = vdwg.mxu0
    %203 = vmatprep.subr.mxu0 0.0
    %204 = vmatpush1.msra.mxu0 0.0
    %205 = vmatprep.subr.mxu0 0.0
    %206 = vmatpush1.msra.mxu0 0.0
    %207 = vmatprep.subr.mxu0 0.0
    %208 = vmatpush1.msra.mxu0 0.0
    %209 = vmatprep.subr.mxu0 0.0
    %210 = vmatpush1.msra.mxu0 0.0
    %211 = vmatprep.subr.mxu0 0.0
    %212 = vmatpush1.msra.mxu0 0.0
    %213 = vmatprep.subr.mxu0 0.0
    %214 = vmatpush1.msra.mxu0 0.0
    %215 = vmatprep.subr.mxu0 0.0
    %216 = vmatpush1.msra.mxu0 0.0
    %217 = vmatprep.subr.mxu0 0.0
    %218 = vmatpush1.msra.mxu0 0.0
    %219 = vmatprep.subr.mxu0 0.0
    %220 = vmatpush1.msra.mxu0 0.0
    %221 = vmatprep.subr.mxu0 0.0
    %222 = vmatpush1.msra.mxu0 0.0
    %223 = vmatprep.subr.mxu0 0.0
    %224 = vmatpush1.msra.mxu0 0.0
    %225 = vmatprep.subr.mxu0 0.0
    %226 = vmatpush1.msra.mxu0 0.0
    %227 = vmatprep.subr.mxu0 0.0
    %228 = vmatpush1.msra.mxu0 0.0
    %229 = vmatprep.subr.mxu0 0.0
    %230 = vmatpush1.msra.mxu0 0.0
    %231 = vmatprep.subr.mxu0 0.0
    %v232 = vand.u32 %v39, 4294901760
    %v233 = vsub.f32 %v39, %v232
    %234 = vmatpush1.msra.mxu0 %v233
    %235 = vmatprep.subr.mxu0 0.0
    %v236 = vand.u32 %v38, 4294901760
    %v237 = vsub.f32 %v38, %v236
    %238 = vmatpush1.msra.mxu0 %v237
    %239 = vmatprep.subr.mxu0 0.0
    %240 = vmatpush2.msra.mxu0 0.0
    %241 = vmatprep.subr.mxu0 0.0
    %242 = vmatpush2.msra.mxu0 0.0
    %243 = vmatprep.subr.mxu0 0.0
    %244 = vmatpush2.msra.mxu0 0.0
    %245 = vmatprep.subr.mxu0 0.0
    %246 = vmatpush2.msra.mxu0 0.0
    %247 = vmatprep.subr.mxu0 0.0
    %248 = vmatpush2.msra.mxu0 0.0
    %249 = vmatprep.subr.mxu0 0.0
    %250 = vmatpush2.msra.mxu0 0.0
    %251 = vmatprep.subr.mxu0 0.0
    %252 = vmatpush2.msra.mxu0 0.0
    %253 = vmatprep.subr.mxu0 0.0
    %254 = vmatpush2.msra.mxu0 0.0
    %255 = vmatprep.subr.mxu0 0.0
    %256 = vmatpush2.msra.mxu0 0.0
    %257 = vmatprep.subr.mxu0 0.0
    %258 = vmatpush2.msra.mxu0 0.0
    %259 = vmatprep.subr.mxu0 0.0
    %260 = vmatpush2.msra.mxu0 0.0
    %261 = vmatprep.subr.mxu0 0.0
    %262 = vmatpush2.msra.mxu0 0.0
    %263 = vmatprep.subr.mxu0 0.0
    %264 = vmatpush2.msra.mxu0 0.0
    %265 = vmatprep.subr.mxu0 0.0
    %266 = vmatpush2.msra.mxu0 0.0
    %267 = vmatprep.subr.mxu0 0.0
    %268 = vmatpush2.msra.mxu0 0.0
    %269 = vmatprep.subr.mxu0 0.0
    %270 = vmatpush2.msra.mxu0 0.0
    %271 = vmatprep.mubr.f32.mxu0 0.0
    %v272 = vand.u32 %v43, 4294901760
    %v273 = vsub.f32 %v43, %v272
    %274 = vmatmul.mubr.f32.gmra.mxu0 %v273
    %v275 = vpop.f32.mrf.mxu0
    %v276 = vadd.f32 %v200, %v275
    %v277 = vpop.f32.mrf.mxu0
    %278 = vdwg.mxu0
    %279 = vmatprep.subr.mxu0 0.0
    %280 = vmatpush1.msra.mxu0 0.0
    %281 = vmatprep.subr.mxu0 0.0
    %282 = vmatpush1.msra.mxu0 0.0
    %283 = vmatprep.subr.mxu0 0.0
    %284 = vmatpush1.msra.mxu0 0.0
    %285 = vmatprep.subr.mxu0 0.0
    %286 = vmatpush1.msra.mxu0 0.0
    %287 = vmatprep.subr.mxu0 0.0
    %288 = vmatpush1.msra.mxu0 0.0
    %289 = vmatprep.subr.mxu0 0.0
    %290 = vmatpush1.msra.mxu0 0.0
    %291 = vmatprep.subr.mxu0 0.0
    %292 = vmatpush1.msra.mxu0 0.0
    %293 = vmatprep.subr.mxu0 0.0
    %294 = vmatpush1.msra.mxu0 0.0
    %295 = vmatprep.subr.mxu0 0.0
    %296 = vmatpush1.msra.mxu0 0.0
    %297 = vmatprep.subr.mxu0 0.0
    %298 = vmatpush1.msra.mxu0 0.0
    %299 = vmatprep.subr.mxu0 0.0
    %300 = vmatpush1.msra.mxu0 0.0
    %301 = vmatprep.subr.mxu0 0.0
    %302 = vmatpush1.msra.mxu0 0.0
    %303 = vmatprep.subr.mxu0 0.0
    %304 = vmatpush1.msra.mxu0 0.0
    %305 = vmatprep.subr.mxu0 0.0
    %306 = vmatpush1.msra.mxu0 0.0
    %307 = vmatprep.subr.mxu0 0.0
    %v308 = vand.u32 %v39, 4294901760
    %309 = vmatpush1.msra.mxu0 %v308
    %310 = vmatprep.subr.mxu0 0.0
    %v311 = vand.u32 %v38, 4294901760
    %312 = vmatpush1.msra.mxu0 %v311
    %313 = vmatprep.subr.mxu0 0.0
    %314 = vmatpush2.msra.mxu0 0.0
    %315 = vmatprep.subr.mxu0 0.0
    %316 = vmatpush2.msra.mxu0 0.0
    %317 = vmatprep.subr.mxu0 0.0
    %318 = vmatpush2.msra.mxu0 0.0
    %319 = vmatprep.subr.mxu0 0.0
    %320 = vmatpush2.msra.mxu0 0.0
    %321 = vmatprep.subr.mxu0 0.0
    %322 = vmatpush2.msra.mxu0 0.0
    %323 = vmatprep.subr.mxu0 0.0
    %324 = vmatpush2.msra.mxu0 0.0
    %325 = vmatprep.subr.mxu0 0.0
    %326 = vmatpush2.msra.mxu0 0.0
    %327 = vmatprep.subr.mxu0 0.0
    %328 = vmatpush2.msra.mxu0 0.0
    %329 = vmatprep.subr.mxu0 0.0
    %330 = vmatpush2.msra.mxu0 0.0
    %331 = vmatprep.subr.mxu0 0.0
    %332 = vmatpush2.msra.mxu0 0.0
    %333 = vmatprep.subr.mxu0 0.0
    %334 = vmatpush2.msra.mxu0 0.0
    %335 = vmatprep.subr.mxu0 0.0
    %336 = vmatpush2.msra.mxu0 0.0
    %337 = vmatprep.subr.mxu0 0.0
    %338 = vmatpush2.msra.mxu0 0.0
    %339 = vmatprep.subr.mxu0 0.0
    %340 = vmatpush2.msra.mxu0 0.0
    %341 = vmatprep.subr.mxu0 0.0
    %342 = vmatpush2.msra.mxu0 0.0
    %343 = vmatprep.subr.mxu0 0.0
    %344 = vmatpush2.msra.mxu0 0.0
    %345 = vmatprep.mubr.f32.mxu0 0.0
    %v346 = vand.u32 %v43, 4294901760
    %v347 = vsub.f32 %v43, %v346
    %v348 = vand.u32 %v347, 4294901760
    %349 = vmatmul.mubr.f32.gmra.mxu0 %v348
    %v350 = vpop.f32.mrf.mxu0
    %v351 = vadd.f32 %v276, %v350
    %v352 = vpop.f32.mrf.mxu0
    %353 = vdwg.mxu0
    %354 = vmatprep.subr.mxu0 0.0
    %355 = vmatpush1.msra.mxu0 0.0
    %356 = vmatprep.subr.mxu0 0.0
    %357 = vmatpush1.msra.mxu0 0.0
    %358 = vmatprep.subr.mxu0 0.0
    %359 = vmatpush1.msra.mxu0 0.0
    %360 = vmatprep.subr.mxu0 0.0
    %361 = vmatpush1.msra.mxu0 0.0
    %362 = vmatprep.subr.mxu0 0.0
    %363 = vmatpush1.msra.mxu0 0.0
    %364 = vmatprep.subr.mxu0 0.0
    %365 = vmatpush1.msra.mxu0 0.0
    %366 = vmatprep.subr.mxu0 0.0
    %367 = vmatpush1.msra.mxu0 0.0
    %368 = vmatprep.subr.mxu0 0.0
    %369 = vmatpush1.msra.mxu0 0.0
    %370 = vmatprep.subr.mxu0 0.0
    %371 = vmatpush1.msra.mxu0 0.0
    %372 = vmatprep.subr.mxu0 0.0
    %373 = vmatpush1.msra.mxu0 0.0
    %374 = vmatprep.subr.mxu0 0.0
    %375 = vmatpush1.msra.mxu0 0.0
    %376 = vmatprep.subr.mxu0 0.0
    %377 = vmatpush1.msra.mxu0 0.0
    %378 = vmatprep.subr.mxu0 0.0
    %379 = vmatpush1.msra.mxu0 0.0
    %380 = vmatprep.subr.mxu0 0.0
    %381 = vmatpush1.msra.mxu0 0.0
    %382 = vmatprep.subr.mxu0 0.0
    %v383 = vand.u32 %v39, 4294901760
    %v384 = vsub.f32 %v39, %v383
    %v385 = vand.u32 %v384, 4294901760
    %386 = vmatpush1.msra.mxu0 %v385
    %387 = vmatprep.subr.mxu0 0.0
    %v388 = vand.u32 %v38, 4294901760
    %v389 = vsub.f32 %v38, %v388
    %v390 = vand.u32 %v389, 4294901760
    %391 = vmatpush1.msra.mxu0 %v390
    %392 = vmatprep.subr.mxu0 0.0
    %393 = vmatpush2.msra.mxu0 0.0
    %394 = vmatprep.subr.mxu0 0.0
    %395 = vmatpush2.msra.mxu0 0.0
    %396 = vmatprep.subr.mxu0 0.0
    %397 = vmatpush2.msra.mxu0 0.0
    %398 = vmatprep.subr.mxu0 0.0
    %399 = vmatpush2.msra.mxu0 0.0
    %400 = vmatprep.subr.mxu0 0.0
    %401 = vmatpush2.msra.mxu0 0.0
    %402 = vmatprep.subr.mxu0 0.0
    %403 = vmatpush2.msra.mxu0 0.0
    %404 = vmatprep.subr.mxu0 0.0
    %405 = vmatpush2.msra.mxu0 0.0
    %406 = vmatprep.subr.mxu0 0.0
    %407 = vmatpush2.msra.mxu0 0.0
    %408 = vmatprep.subr.mxu0 0.0
    %409 = vmatpush2.msra.mxu0 0.0
    %410 = vmatprep.subr.mxu0 0.0
    %411 = vmatpush2.msra.mxu0 0.0
    %412 = vmatprep.subr.mxu0 0.0
    %413 = vmatpush2.msra.mxu0 0.0
    %414 = vmatprep.subr.mxu0 0.0
    %415 = vmatpush2.msra.mxu0 0.0
    %416 = vmatprep.subr.mxu0 0.0
    %417 = vmatpush2.msra.mxu0 0.0
    %418 = vmatprep.subr.mxu0 0.0
    %419 = vmatpush2.msra.mxu0 0.0
    %420 = vmatprep.subr.mxu0 0.0
    %421 = vmatpush2.msra.mxu0 0.0
    %422 = vmatprep.subr.mxu0 0.0
    %423 = vmatpush2.msra.mxu0 0.0
    %424 = vmatprep.mubr.f32.mxu0 0.0
    %v425 = vand.u32 %v43, 4294901760
    %426 = vmatmul.mubr.f32.gmra.mxu0 %v425
    %v427 = vpop.f32.mrf.mxu0
    %v428 = vadd.f32 %v351, %v427
    %v429 = vpop.f32.mrf.mxu0
    %430 = vdwg.mxu0
    %431 = vmatprep.subr.mxu0 0.0
    %432 = vmatpush1.msra.mxu0 0.0
    %433 = vmatprep.subr.mxu0 0.0
    %434 = vmatpush1.msra.mxu0 0.0
    %435 = vmatprep.subr.mxu0 0.0
    %436 = vmatpush1.msra.mxu0 0.0
    %437 = vmatprep.subr.mxu0 0.0
    %438 = vmatpush1.msra.mxu0 0.0
    %439 = vmatprep.subr.mxu0 0.0
    %440 = vmatpush1.msra.mxu0 0.0
    %441 = vmatprep.subr.mxu0 0.0
    %442 = vmatpush1.msra.mxu0 0.0
    %443 = vmatprep.subr.mxu0 0.0
    %444 = vmatpush1.msra.mxu0 0.0
    %445 = vmatprep.subr.mxu0 0.0
    %446 = vmatpush1.msra.mxu0 0.0
    %447 = vmatprep.subr.mxu0 0.0
    %448 = vmatpush1.msra.mxu0 0.0
    %449 = vmatprep.subr.mxu0 0.0
    %450 = vmatpush1.msra.mxu0 0.0
    %451 = vmatprep.subr.mxu0 0.0
    %452 = vmatpush1.msra.mxu0 0.0
    %453 = vmatprep.subr.mxu0 0.0
    %454 = vmatpush1.msra.mxu0 0.0
    %455 = vmatprep.subr.mxu0 0.0
    %456 = vmatpush1.msra.mxu0 0.0
    %457 = vmatprep.subr.mxu0 0.0
    %458 = vmatpush1.msra.mxu0 0.0
    %459 = vmatprep.subr.mxu0 0.0
    %v460 = vand.u32 %v39, 4294901760
    %461 = vmatpush1.msra.mxu0 %v460
    %462 = vmatprep.subr.mxu0 0.0
    %v463 = vand.u32 %v38, 4294901760
    %464 = vmatpush1.msra.mxu0 %v463
    %465 = vmatprep.subr.mxu0 0.0
    %466 = vmatpush2.msra.mxu0 0.0
    %467 = vmatprep.subr.mxu0 0.0
    %468 = vmatpush2.msra.mxu0 0.0
    %469 = vmatprep.subr.mxu0 0.0
    %470 = vmatpush2.msra.mxu0 0.0
    %471 = vmatprep.subr.mxu0 0.0
    %472 = vmatpush2.msra.mxu0 0.0
    %473 = vmatprep.subr.mxu0 0.0
    %474 = vmatpush2.msra.mxu0 0.0
    %475 = vmatprep.subr.mxu0 0.0
    %476 = vmatpush2.msra.mxu0 0.0
    %477 = vmatprep.subr.mxu0 0.0
    %478 = vmatpush2.msra.mxu0 0.0
    %479 = vmatprep.subr.mxu0 0.0
    %480 = vmatpush2.msra.mxu0 0.0
    %481 = vmatprep.subr.mxu0 0.0
    %482 = vmatpush2.msra.mxu0 0.0
    %483 = vmatprep.subr.mxu0 0.0
    %484 = vmatpush2.msra.mxu0 0.0
    %485 = vmatprep.subr.mxu0 0.0
    %486 = vmatpush2.msra.mxu0 0.0
    %487 = vmatprep.subr.mxu0 0.0
    %488 = vmatpush2.msra.mxu0 0.0
    %489 = vmatprep.subr.mxu0 0.0
    %490 = vmatpush2.msra.mxu0 0.0
    %491 = vmatprep.subr.mxu0 0.0
    %492 = vmatpush2.msra.mxu0 0.0
    %493 = vmatprep.subr.mxu0 0.0
    %494 = vmatpush2.msra.mxu0 0.0
    %495 = vmatprep.subr.mxu0 0.0
    %496 = vmatpush2.msra.mxu0 0.0
    %497 = vmatprep.mubr.f32.mxu0 0.0
    %v498 = vand.u32 %v43, 4294901760
    %499 = vmatmul.mubr.f32.gmra.mxu0 %v498
    %v500 = vpop.f32.mrf.mxu0
    %v501 = vadd.f32 %v428, %v500
    %v502 = vpop.f32.mrf.mxu0
    %503 = vdwg.mxu0
    %vm504 = vcmask 261120
    %505 = vst.msk [vmem:[#allocation5] sm:$0xff] %vm504, %v501
    // Predicated region
    $region10: #{tpu_custom_call.1} parent=1 // pred_check
      _
    $region11: #{tpu_custom_call.1} parent=1 // pred_check_branch
      %507 = sbr.rel (0) target = $region13
    $region12: #{tpu_custom_call.1} parent=1 // pred_region
      %s509 = ssub.s32 128, 128
      %510 = vsyncadd [#allocation4], %s509
      %s512 = sshll.u32 [#allocation5], 4
      %s513 = int_to_ptr.vmem [resolvable:$true] %s512
      %515 = dma.vmem_to_hbm [thread:$0]  %s513, 128, %s1, [#allocation4]
    $region13: #{tpu_custom_call.1} parent=1 // pred_fallthru
      _
    // Predicated region
    $region14: #{tpu_custom_call.1} parent=1 // pred_check
      _
    $region15: #{tpu_custom_call.1} parent=1 // pred_check_branch
      %517 = sbr.rel (0) target = $region17
    $region16: #{tpu_custom_call.1} parent=1 // pred_region
      %518 = dma.done [#allocation4], 128
    $region17: #{tpu_custom_call.1} parent=1 // pred_fallthru
      _
    %519 = vsyncpa [#allocation3], 1
    %520 = vsyncpa [#allocation4], 1

</llo_original>
